<compile_context>
chip_gen: v7x
topology: tpu7x:2x2x1
jax: 0.10.0
libtpu: 0.0.40
codegen_flags: <defaults>
</compile_context>

<pallas_src>
import functools

import jax
import jax.numpy as jnp
from jax.experimental import pallas as pl
from jax.experimental.pallas import tpu as pltpu

EPS = 1e-5
KERNEL_SIZES = (8, 5, 3)
# PyTorch 'same' padding: left = (k-1)//2, right = (k-1) - left (asymmetric for k=8)
PADS = tuple(((k - 1) // 2, (k - 1) - (k - 1) // 2) for k in KERNEL_SIZES)

VMEM_LIMIT = 32 * 1024 * 1024   # explicit scoped-VMEM budget; safe on v5e/v6e/v7x


# ----------------------- in-kernel building blocks -----------------------

def _conv1d_same_2d(a, w2d, k, left, right, matmul_dtype):
    """a: (C, L) f32, w2d: (Cout, K*Cin). Returns (Cout, L) f32.

    Single im2col matmul (contraction K*Cin) instead of K tiny Cin-deep matmuls.
    """
    c, l = a.shape
    ap = jnp.concatenate(
        [jnp.zeros((c, left), a.dtype), a, jnp.zeros((c, right), a.dtype)], axis=1)
    # tap-major stacking: row index = t*Cin + ci  (matches w2d layout built in wrapper)
    xcol = jnp.concatenate([ap[:, t:t + l] for t in range(k)], axis=0)   # (K*C, L)
    return jnp.dot(w2d.astype(matmul_dtype), xcol.astype(matmul_dtype),
                   preferred_element_type=jnp.float32)


# ------------------------------- kernels ----------------------------------

def _conv_pass_kernel(scale_ref, shift_ref, w_ref, x_ref,
                      h_ref, sum_ref, ssq_ref,
                      *, k, left, right, normalize, relu, matmul_dtype):
    """One sample: (optional fused BN apply + ReLU of previous block) -> conv -> partial stats."""
    a = x_ref[...].astype(jnp.float32)                       # (C, L)
    if normalize:                                            # fused BN apply: 1 FMA/elem
        a = a * scale_ref[...] + shift_ref[...]              # (C,1) broadcasts over L
        if relu:
            a = jnp.maximum(a, 0.0)
    h = _conv1d_same_2d(a, w_ref[...], k, left, right, matmul_dtype)     # (C, L) f32
    h_ref[...] = h.astype(h_ref.dtype)
    # accumulable BN statistics of the conv output (E[x], E[x^2] form)
    sum_ref[...] = jnp.sum(h, axis=1, keepdims=True)          # (C, 1)
    ssq_ref[...] = jnp.sum(h * h, axis=1, keepdims=True)      # (C, 1)


def _final_pass_kernel(scale_ref, shift_ref, h_ref, x_ref, y_ref):
    """BN3 apply + residual add + final ReLU."""
    h = h_ref[...].astype(jnp.float32) * scale_ref[...] + shift_ref[...]
    y_ref[...] = jnp.maximum(h + x_ref[...].astype(jnp.float32), 0.0).astype(y_ref.dtype)


# ------------------------------ pass builders ------------------------------

def _conv_pass(x, w2d, scale, shift, *, k, left, right, normalize, relu,
               matmul_dtype):
    n, c, l = x.shape
    kern = functools.partial(_conv_pass_kernel, k=k, left=left, right=right,
                             normalize=normalize, relu=relu,
                             matmul_dtype=matmul_dtype)
    flops = 2 * n * l * k * c * c + 4 * n * c * l
    bytes_accessed = (2 * n * c * l + 2 * n * c + k * c * c + 2 * c) * 4
    return pl.pallas_call(
        kern,
        grid=(n,),
        in_specs=[
            pl.BlockSpec((c, 1), lambda i: (0, 0)),              # scale  (prev BN)
            pl.BlockSpec((c, 1), lambda i: (0, 0)),              # shift  (prev BN)
            pl.BlockSpec((c, k * c), lambda i: (0, 0)),          # im2col weight
            pl.BlockSpec((None, c, l), lambda i: (i, 0, 0)),     # one sample (C, L)
        ],
        out_specs=[
            pl.BlockSpec((None, c, l), lambda i: (i, 0, 0)),     # conv output tile
            pl.BlockSpec((None, c, 1), lambda i: (i, 0, 0)),     # per-sample sum
            pl.BlockSpec((None, c, 1), lambda i: (i, 0, 0)),     # per-sample sumsq
        ],
        out_shape=[
            jax.ShapeDtypeStruct((n, c, l), jnp.float32),
            jax.ShapeDtypeStruct((n, c, 1), jnp.float32),
            jax.ShapeDtypeStruct((n, c, 1), jnp.float32),
        ],
        compiler_params=pltpu.CompilerParams(
            dimension_semantics=("parallel",),                    # megacore on v7x
            vmem_limit_bytes=VMEM_LIMIT),
        cost_estimate=pl.CostEstimate(flops=flops, transcendentals=0,
                                      bytes_accessed=bytes_accessed),
    )(scale, shift, w2d, x)


def _final_pass(h, x, scale, shift):
    n, c, l = x.shape
    bytes_accessed = (3 * n * c * l + 2 * c) * 4
    return pl.pallas_call(
        _final_pass_kernel,
        grid=(n,),
        in_specs=[
            pl.BlockSpec((c, 1), lambda i: (0, 0)),
            pl.BlockSpec((c, 1), lambda i: (0, 0)),
            pl.BlockSpec((None, c, l), lambda i: (i, 0, 0)),     # h3 tile
            pl.BlockSpec((None, c, l), lambda i: (i, 0, 0)),     # residual x tile
        ],
        out_specs=pl.BlockSpec((None, c, l), lambda i: (i, 0, 0)),
        out_shape=jax.ShapeDtypeStruct((n, c, l), jnp.float32),
        compiler_params=pltpu.CompilerParams(
            dimension_semantics=("parallel",),
            vmem_limit_bytes=VMEM_LIMIT),
        cost_estimate=pl.CostEstimate(flops=4 * n * c * l, transcendentals=0,
                                      bytes_accessed=bytes_accessed),
    )(scale, shift, h, x)


def _bn_scale_shift(psum, pssq, gamma, beta, count):
    """Finalize BN from accumulable partials (tiny (C,)-sized math, plain JAX)."""
    total = jnp.sum(psum, axis=0)                  # (C, 1)
    total2 = jnp.sum(pssq, axis=0)                 # (C, 1)
    mean = total / count
    var = jnp.maximum(total2 / count - mean * mean, 0.0)
    scale = gamma.reshape(-1, 1) * jax.lax.rsqrt(var + EPS)
    shift = beta.reshape(-1, 1) - mean * scale
    return scale.astype(jnp.float32), shift.astype(jnp.float32)


# ------------------------------ wrapper -----------------------------------

def residual_block(x_ncl, params, *, matmul_dtype=jnp.float32):
    """x_ncl: (N, C, L) float32 (PyTorch Conv1d layout). Returns (N, C, L).

    params: list of 3 tuples (w (C,C,K), b (C,), gamma (C,), beta (C,)).
    Conv biases are dropped inside the kernels: training-mode BatchNorm subtracts
    the per-channel batch mean, which cancels a per-channel bias exactly.
    NOTE: set matmul_dtype=jnp.bfloat16 on v6e/v7x for 2x MXU rate / half the
    im2col bytes; default f32 to match the f32 PyTorch reference tightly.
    """
    n, c, l = x_ncl.shape
    count = float(n * l)

    # torch Conv1d weight (Cout, Cin, K) -> im2col weight (Cout, K*Cin),
    # tap-major to match the in-kernel im2col row order (row = t*Cin + ci).
    w2ds = [jnp.transpose(w, (0, 2, 1)).reshape(c, k * c).astype(jnp.float32)
            for (w, _, _, _), k in zip(params, KERNEL_SIZES)]

    ones = jnp.ones((c, 1), jnp.float32)     # dummies for pass 1 (normalize=False)
    zeros = jnp.zeros((c, 1), jnp.float32)

    # Pass 1: conv1(x) + partial BN1 stats
    h, ps, pss = _conv_pass(x_ncl, w2ds[0], ones, zeros,
                            k=KERNEL_SIZES[0], left=PADS[0][0], right=PADS[0][1],
                            normalize=False, relu=False, matmul_dtype=matmul_dtype)
    scale, shift = _bn_scale_shift(ps, pss, params[0][2], params[0][3], count)

    # Pass 2: BN1 + ReLU fused with conv2 + partial BN2 stats
    h, ps, pss = _conv_pass(h, w2ds[1], scale, shift,
                            k=KERNEL_SIZES[1], left=PADS[1][0], right=PADS[1][1],
                            normalize=True, relu=True, matmul_dtype=matmul_dtype)
    scale, shift = _bn_scale_shift(ps, pss, params[1][2], params[1][3], count)

    # Pass 3: BN2 + ReLU fused with conv3 + partial BN3 stats
    h, ps, pss = _conv_pass(h, w2ds[2], scale, shift,
                            k=KERNEL_SIZES[2], left=PADS[2][0], right=PADS[2][1],
                            normalize=True, relu=True, matmul_dtype=matmul_dtype)
    scale, shift = _bn_scale_shift(ps, pss, params[2][2], params[2][3], count)

    # Pass 4: BN3 + residual add + final ReLU
    return _final_pass(h, x_ncl, scale, shift)


# ---------------------------- pure-JAX reference ---------------------------

def residual_block_ref(x_ncl, params):
    x0 = x_ncl.astype(jnp.float32)
    h = x0
    for i, ((w, b, g, be), (lp, rp)) in enumerate(zip(params, PADS)):
        h = jax.lax.conv_general_dilated(
            h, w.astype(jnp.float32), window_strides=(1,), padding=[(lp, rp)],
            dimension_numbers=('NCW', 'OIW', 'NCW')) + b[None, :, None]
        mean = jnp.mean(h, axis=(0, 2), keepdims=True)
        var = jnp.mean(jnp.square(h - mean), axis=(0, 2), keepdims=True)
        h = (h - mean) * jax.lax.rsqrt(var + EPS) * g[None, :, None] + be[None, :, None]
        if i < 2:
            h = jnp.maximum(h, 0.0)
    return jnp.maximum(h + x0, 0.0)


# -------------------------------- main -------------------------------------

if __name__ == "__main__":
    N, C, L = 2, 4, 16
    key = jax.random.PRNGKey(0)
    keys = jax.random.split(key, 1 + 4 * len(KERNEL_SIZES))

    x = jax.random.normal(keys[0], (N, C, L), jnp.float32)

    params = []
    ki = 1
    for k in KERNEL_SIZES:
        w = 0.2 * jax.random.normal(keys[ki + 0], (C, C, k), jnp.float32)   # (Cout,Cin,K)
        b = 0.1 * jax.random.normal(keys[ki + 1], (C,), jnp.float32)
        g = 1.0 + 0.1 * jax.random.normal(keys[ki + 2], (C,), jnp.float32)
        be = 0.1 * jax.random.normal(keys[ki + 3], (C,), jnp.float32)
        params.append((w, b, g, be))
        ki += 4

    y = jax.block_until_ready(residual_block(x, params))
    y_ref = jax.block_until_ready(residual_block_ref(x, params))

    assert y.shape == (N, C, L)
    assert jnp.allclose(y, y_ref, atol=1e-4, rtol=1e-4), "mismatch vs JAX reference"
    print("KERNEL_OK")
</pallas_src>

<mosaic_0001>
module attributes {stable_mosaic.version = 11 : i64} {
  func.func @_conv_pass_kernel(%arg0: i32, %arg1: memref<4x1xf32, #tpu.memory_space<vmem>>, %arg2: memref<4x1xf32, #tpu.memory_space<vmem>>, %arg3: memref<4x32xf32, #tpu.memory_space<vmem>>, %arg4: memref<1x4x16xf32, #tpu.memory_space<vmem>>, %arg5: memref<1x4x16xf32, #tpu.memory_space<vmem>>, %arg6: memref<1x4x1xf32, #tpu.memory_space<vmem>>, %arg7: memref<1x4x1xf32, #tpu.memory_space<vmem>>) attributes {dimension_semantics = [#tpu.dimension_semantics<parallel>], iteration_bounds = array<i64: 2>, scalar_prefetch = 0 : i64, scratch_operands = 0 : i64, tpu.core_type = #tpu.core_type<tc>, window_params = [{pipeline_mode = #tpu.pipeline_mode<synchronous>, transform_indices = @transform_0, window_bounds = array<i64: 4, 1>}, {pipeline_mode = #tpu.pipeline_mode<synchronous>, transform_indices = @transform_1, window_bounds = array<i64: 4, 1>}, {pipeline_mode = #tpu.pipeline_mode<synchronous>, transform_indices = @transform_2, window_bounds = array<i64: 4, 32>}, {transform_indices = @transform_3, window_bounds = array<i64: 1, 4, 16>}, {transform_indices = @transform_4, window_bounds = array<i64: 1, 4, 16>}, {transform_indices = @transform_5, window_bounds = array<i64: 1, 4, 1>}, {transform_indices = @transform_6, window_bounds = array<i64: 1, 4, 1>}]} {
    %c0 = arith.constant 0 : index
    %c0_0 = arith.constant 0 : index
    %c0_1 = arith.constant 0 : index
    %0 = vector.load %arg4[%c0, %c0_0, %c0_1] : memref<1x4x16xf32, #tpu.memory_space<vmem>>, vector<1x4x16xf32>
    %1 = vector.shape_cast %0 : vector<1x4x16xf32> to vector<4x16xf32>
    %c0_2 = arith.constant 0 : index
    %c0_3 = arith.constant 0 : index
    %2 = vector.load %arg3[%c0_2, %c0_3] : memref<4x32xf32, #tpu.memory_space<vmem>>, vector<4x32xf32>
    %cst = arith.constant 0.000000e+00 : f32
    %3 = vector.broadcast %cst : f32 to vector<4x3xf32>
    %cst_4 = arith.constant 0.000000e+00 : f32
    %4 = vector.broadcast %cst_4 : f32 to vector<4x4xf32>
    %5 = tpu.concatenate %3, %1, %4 in 1 : vector<4x3xf32>, vector<4x16xf32>, vector<4x4xf32> -> vector<4x23xf32>
    %6 = vector.extract_strided_slice %5 {offsets = [0, 0], sizes = [4, 16], strides = [1, 1]} : vector<4x23xf32> to vector<4x16xf32>
    %7 = vector.extract_strided_slice %5 {offsets = [0, 1], sizes = [4, 16], strides = [1, 1]} : vector<4x23xf32> to vector<4x16xf32>
    %8 = vector.extract_strided_slice %5 {offsets = [0, 2], sizes = [4, 16], strides = [1, 1]} : vector<4x23xf32> to vector<4x16xf32>
    %9 = vector.extract_strided_slice %5 {offsets = [0, 3], sizes = [4, 16], strides = [1, 1]} : vector<4x23xf32> to vector<4x16xf32>
    %10 = vector.extract_strided_slice %5 {offsets = [0, 4], sizes = [4, 16], strides = [1, 1]} : vector<4x23xf32> to vector<4x16xf32>
    %11 = vector.extract_strided_slice %5 {offsets = [0, 5], sizes = [4, 16], strides = [1, 1]} : vector<4x23xf32> to vector<4x16xf32>
    %12 = vector.extract_strided_slice %5 {offsets = [0, 6], sizes = [4, 16], strides = [1, 1]} : vector<4x23xf32> to vector<4x16xf32>
    %13 = vector.extract_strided_slice %5 {offsets = [0, 7], sizes = [4, 16], strides = [1, 1]} : vector<4x23xf32> to vector<4x16xf32>
    %14 = tpu.concatenate %6, %7, %8, %9, %10, %11, %12, %13 in 0 : vector<4x16xf32>, vector<4x16xf32>, vector<4x16xf32>, vector<4x16xf32>, vector<4x16xf32>, vector<4x16xf32>, vector<4x16xf32>, vector<4x16xf32> -> vector<32x16xf32>
    %cst_5 = arith.constant dense<0.000000e+00> : vector<4x16xf32>
    %15 = tpu.matmul %2, %14, %cst_5 {dimension_numbers = #tpu.dot_dimension_numbers<[1], [0], [0], [1], [0, 0, 1, 1], [], []>} : vector<4x32xf32>, vector<32x16xf32>, vector<4x16xf32> -> vector<4x16xf32>
    %c0_6 = arith.constant 0 : index
    %c0_7 = arith.constant 0 : index
    %c0_8 = arith.constant 0 : index
    %16 = vector.load %arg5[%c0_6, %c0_7, %c0_8] : memref<1x4x16xf32, #tpu.memory_space<vmem>>, vector<1x4x16xf32>
    %17 = vector.shape_cast %16 : vector<1x4x16xf32> to vector<4x16xf32>
    %18 = vector.shape_cast %15 : vector<4x16xf32> to vector<1x4x16xf32>
    tpu.vector_store %arg5[%c0_6, %c0_7, %c0_8], %18 {strides = array<i32>} : memref<1x4x16xf32, #tpu.memory_space<vmem>>, vector<1x4x16xf32>,
    %cst_9 = arith.constant dense<0.000000e+00> : vector<4xf32>
    %19 = vector.multi_reduction <add>, %15, %cst_9 [1] : vector<4x16xf32> to vector<4xf32>
    %20 = vector.shape_cast %19 : vector<4xf32> to vector<4x1xf32>
    %c0_10 = arith.constant 0 : index
    %c0_11 = arith.constant 0 : index
    %c0_12 = arith.constant 0 : index
    %21 = vector.load %arg6[%c0_10, %c0_11, %c0_12] : memref<1x4x1xf32, #tpu.memory_space<vmem>>, vector<1x4x1xf32>
    %22 = vector.shape_cast %21 : vector<1x4x1xf32> to vector<4x1xf32>
    %23 = vector.shape_cast %20 : vector<4x1xf32> to vector<1x4x1xf32>
    tpu.vector_store %arg6[%c0_10, %c0_11, %c0_12], %23 {strides = array<i32>} : memref<1x4x1xf32, #tpu.memory_space<vmem>>, vector<1x4x1xf32>,
    %24 = arith.mulf %15, %15 : vector<4x16xf32>
    %cst_13 = arith.constant dense<0.000000e+00> : vector<4xf32>
    %25 = vector.multi_reduction <add>, %24, %cst_13 [1] : vector<4x16xf32> to vector<4xf32>
    %26 = vector.shape_cast %25 : vector<4xf32> to vector<4x1xf32>
    %c0_14 = arith.constant 0 : index
    %c0_15 = arith.constant 0 : index
    %c0_16 = arith.constant 0 : index
    %27 = vector.load %arg7[%c0_14, %c0_15, %c0_16] : memref<1x4x1xf32, #tpu.memory_space<vmem>>, vector<1x4x1xf32>
    %28 = vector.shape_cast %27 : vector<1x4x1xf32> to vector<4x1xf32>
    %29 = vector.shape_cast %26 : vector<4x1xf32> to vector<1x4x1xf32>
    tpu.vector_store %arg7[%c0_14, %c0_15, %c0_16], %29 {strides = array<i32>} : memref<1x4x1xf32, #tpu.memory_space<vmem>>, vector<1x4x1xf32>,
    return
  }
  func.func @transform_0(%arg0: i32) -> (i32, i32) {
    %c0_i32 = arith.constant 0 : i32
    %c0_i32_0 = arith.constant 0 : i32
    %c0_i32_1 = arith.constant 0 : i32
    return %c0_i32, %c0_i32_0 : i32, i32
  }
  func.func @transform_1(%arg0: i32) -> (i32, i32) {
    %c0_i32 = arith.constant 0 : i32
    %c0_i32_0 = arith.constant 0 : i32
    %c0_i32_1 = arith.constant 0 : i32
    return %c0_i32, %c0_i32_0 : i32, i32
  }
  func.func @transform_2(%arg0: i32) -> (i32, i32) {
    %c0_i32 = arith.constant 0 : i32
    %c0_i32_0 = arith.constant 0 : i32
    %c0_i32_1 = arith.constant 0 : i32
    return %c0_i32, %c0_i32_0 : i32, i32
  }
  func.func @transform_3(%arg0: i32) -> (i32, i32, i32) {
    %c0_i32 = arith.constant 0 : i32
    %c0_i32_0 = arith.constant 0 : i32
    %c0_i32_1 = arith.constant 0 : i32
    return %arg0, %c0_i32, %c0_i32_0 : i32, i32, i32
  }
  func.func @transform_4(%arg0: i32) -> (i32, i32, i32) {
    %c0_i32 = arith.constant 0 : i32
    %c0_i32_0 = arith.constant 0 : i32
    %c0_i32_1 = arith.constant 0 : i32
    return %arg0, %c0_i32, %c0_i32_0 : i32, i32, i32
  }
  func.func @transform_5(%arg0: i32) -> (i32, i32, i32) {
    %c0_i32 = arith.constant 0 : i32
    %c0_i32_0 = arith.constant 0 : i32
    %c0_i32_1 = arith.constant 0 : i32
    return %arg0, %c0_i32, %c0_i32_0 : i32, i32, i32
  }
  func.func @transform_6(%arg0: i32) -> (i32, i32, i32) {
    %c0_i32 = arith.constant 0 : i32
    %c0_i32_0 = arith.constant 0 : i32
    %c0_i32_1 = arith.constant 0 : i32
    return %arg0, %c0_i32, %c0_i32_0 : i32, i32, i32
  }
}

</mosaic_0001>

<llo_original>
// kernel: tpu_custom_call.1
$region0: #{tpu_custom_call.1}
  #allocation0 [shape = 'u32[]', space=smem, size = 0x4, offset = 0x4, fixed_abs, tag = 'smem constant byte address 0x4 - core index']
  #allocation1 [shape = 'u32[144,128]{1,0:T(1,128)}', space=vmem, size = 0x12000, scoped, tag = 'internal scratch']
  %s0 = inlined_call_operand.vmem [shape: f32[4,1], index: 0, kind: input, shape index: {}]
  %s1 = inlined_call_operand.vmem [shape: f32[4,1], index: 1, kind: input, shape index: {}]
  %s2 = inlined_call_operand.vmem [shape: f32[4,32], index: 2, kind: input, shape index: {}]
  %s3 = inlined_call_operand.vmem [shape: f32[2,4,16], index: 3, kind: input, shape index: {}]
  %s4 = inlined_call_operand.hbm [shape: f32[2,4,16], index: 4, kind: output, shape index: {0}]
  %s5 = inlined_call_operand.vmem [shape: f32[2,4,1], index: 5, kind: output, shape index: {1}]
  %s6 = inlined_call_operand.vmem [shape: f32[2,4,1], index: 6, kind: output, shape index: {2}]
  %7 = xla_tuple %s4, %s5, %s6
  %s8 = sld [smem:[#allocation0]]
  $region65: #{tpu_custom_call.1} parent=0
    _
  %s10 = ssub.s32 1, %s8
  %s11 = scalar_select 0, %s10, %s8
  $region1: #{tpu_custom_call.1} parent=0
    #allocation2 [shape = 'u8[4096]{0}', space=vmem, size = 0x1000, scoped, tag = 'output window, operand 0']
    #allocation3 [shape = 's32[2]{0}', space=sflag, size = 0x8, scoped, tag = 'scoped memory for tpu_custom_call.1']
    %12 = vsyncpa [#allocation3], 0
    %s13 = scalar_lea.sflag [#allocation3], 1
    %14 = vsyncpa %s13, 0
    loop: start=0, step=1, limit=4
    $region2: #{tpu_custom_call.1} parent=1 // loop_pre_header
      _
    $region3: #{tpu_custom_call.1} parent=1 // loop_header
      %s16 = sphi 0, %s20
      %p17 = scmp.ge.s32.totalorder %s16, 4
      %s24 = sphi 0, %s24
      %s26 = sphi 0, %s24
      %s27 = sphi 0, %s26
      %s41 = sphi 0, %s27
      %s45 = sphi 0, %s45
      %s47 = sphi 0, %s45
      %s48 = sphi 0, %s47
      %s62 = sphi 0, %s48
      %s66 = sphi 0, %s66
      %s68 = sphi 0, %s66
      %s69 = sphi 0, %s68
      %s83 = sphi 0, %s69
      %s89 = sphi 0, %s91
      %s92 = sphi 0, %s89
      %s93 = sphi 0, %s92
      %s109 = sphi 0, %s93
      %s115 = sphi 0, %s117
      %s118 = sphi 0, %s115
      %s119 = sphi 0, %s118
      %s135 = sphi 0, %s119
      %s141 = sphi 0, %s143
      %s144 = sphi 0, %s141
      %s145 = sphi 0, %s144
      %s161 = sphi 0, %s145
      %s167 = sphi 0, %s169
      %s170 = sphi 0, %s167
      %s171 = sphi 0, %s170
      %s187 = sphi 0, %s171
    $region4: #{tpu_custom_call.1} parent=1 // loop_header_branch
      %19 = sbr.rel (%p17) target = $region8
    $region5: #{tpu_custom_call.1} parent=1 // loop_body
      %s21 = ssub.s32 %s16, 1
      %s22 = ssub.s32 %s16, 2
      %s23 = sadd.s32 %s16, 1
      %s25 = sadd.s32 %s24, 1
      %p28 = scmp.eq.s32.totalorder %s16, 1
      %p29 = scmp.ne.s32.totalorder %s24, %s26
      %p30 = scmp.eq.s32.totalorder %s16, 0
      %p31 = por %p29, %p30
      %p32 = scmp.ne.s32.totalorder %s24, %s26
      %p33 = scmp.eq.s32.totalorder %s21, 1
      %p34 = por %p32, %p33
      %p35 = scmp.ne.s32.totalorder %s26, %s27
      %p36 = scmp.eq.s32.totalorder %s21, 0
      %p37 = por %p35, %p36
      %p38 = scmp.ne.s32.totalorder %s26, %s27
      %p39 = scmp.eq.s32.totalorder %s22, 1
      %p40 = por %p38, %p39
      %p42 = scmp.ne.s32.totalorder %s27, %s41
      %p43 = scmp.eq.s32.totalorder %s22, 0
      %p44 = por %p42, %p43
      %s46 = sadd.s32 %s45, 1
      %p49 = scmp.eq.s32.totalorder %s16, 1
      %p50 = scmp.ne.s32.totalorder %s45, %s47
      %p51 = scmp.eq.s32.totalorder %s16, 0
      %p52 = por %p50, %p51
      %p53 = scmp.ne.s32.totalorder %s45, %s47
      %p54 = scmp.eq.s32.totalorder %s21, 1
      %p55 = por %p53, %p54
      %p56 = scmp.ne.s32.totalorder %s47, %s48
      %p57 = scmp.eq.s32.totalorder %s21, 0
      %p58 = por %p56, %p57
      %p59 = scmp.ne.s32.totalorder %s47, %s48
      %p60 = scmp.eq.s32.totalorder %s22, 1
      %p61 = por %p59, %p60
      %p63 = scmp.ne.s32.totalorder %s48, %s62
      %p64 = scmp.eq.s32.totalorder %s22, 0
      %p65 = por %p63, %p64
      %s67 = sadd.s32 %s66, 1
      %p70 = scmp.eq.s32.totalorder %s16, 1
      %p71 = scmp.ne.s32.totalorder %s66, %s68
      %p72 = scmp.eq.s32.totalorder %s16, 0
      %p73 = por %p71, %p72
      %p74 = scmp.ne.s32.totalorder %s66, %s68
      %p75 = scmp.eq.s32.totalorder %s21, 1
      %p76 = por %p74, %p75
      %p77 = scmp.ne.s32.totalorder %s68, %s69
      %p78 = scmp.eq.s32.totalorder %s21, 0
      %p79 = por %p77, %p78
      %p80 = scmp.ne.s32.totalorder %s68, %s69
      %p81 = scmp.eq.s32.totalorder %s22, 1
      %p82 = por %p80, %p81
      %p84 = scmp.ne.s32.totalorder %s69, %s83
      %p85 = scmp.eq.s32.totalorder %s22, 0
      %p86 = por %p84, %p85
      %s87 = ssub.s32 %s16, %s23
      %p88 = scmp.eq.s32.totalorder %s87, 0
      %s90 = sadd.s32 %s89, 1
      %s91 = scalar_select %p88, %s89, %s90
      %p94 = pneg %p88
      %p95 = scmp.eq.s32.totalorder %s16, 1
      %p96 = por %p94, %p95
      %p97 = scmp.ne.s32.totalorder %s89, %s92
      %p98 = scmp.eq.s32.totalorder %s16, 0
      %p99 = por %p97, %p98
      %p100 = scmp.ne.s32.totalorder %s89, %s92
      %p101 = scmp.eq.s32.totalorder %s21, 1
      %p102 = por %p100, %p101
      %p103 = scmp.ne.s32.totalorder %s92, %s93
      %p104 = scmp.eq.s32.totalorder %s21, 0
      %p105 = por %p103, %p104
      %p106 = scmp.ne.s32.totalorder %s92, %s93
      %p107 = scmp.eq.s32.totalorder %s22, 1
      %p108 = por %p106, %p107
      %p110 = scmp.ne.s32.totalorder %s93, %s109
      %p111 = scmp.eq.s32.totalorder %s22, 0
      %p112 = por %p110, %p111
      %s113 = ssub.s32 %s16, %s23
      %p114 = scmp.eq.s32.totalorder %s113, 0
      %s116 = sadd.s32 %s115, 1
      %s117 = scalar_select %p114, %s115, %s116
      %p120 = pneg %p114
      %p121 = scmp.eq.s32.totalorder %s16, 1
      %p122 = por %p120, %p121
      %p123 = scmp.ne.s32.totalorder %s115, %s118
      %p124 = scmp.eq.s32.totalorder %s16, 0
      %p125 = por %p123, %p124
      %p126 = scmp.ne.s32.totalorder %s115, %s118
      %p127 = scmp.eq.s32.totalorder %s21, 1
      %p128 = por %p126, %p127
      %p129 = scmp.ne.s32.totalorder %s118, %s119
      %p130 = scmp.eq.s32.totalorder %s21, 0
      %p131 = por %p129, %p130
      %p132 = scmp.ne.s32.totalorder %s118, %s119
      %p133 = scmp.eq.s32.totalorder %s22, 1
      %p134 = por %p132, %p133
      %p136 = scmp.ne.s32.totalorder %s119, %s135
      %p137 = scmp.eq.s32.totalorder %s22, 0
      %p138 = por %p136, %p137
      %s139 = ssub.s32 %s16, %s23
      %p140 = scmp.eq.s32.totalorder %s139, 0
      %s142 = sadd.s32 %s141, 1
      %s143 = scalar_select %p140, %s141, %s142
      %p146 = pneg %p140
      %p147 = scmp.eq.s32.totalorder %s16, 1
      %p148 = por %p146, %p147
      %p149 = scmp.ne.s32.totalorder %s141, %s144
      %p150 = scmp.eq.s32.totalorder %s16, 0
      %p151 = por %p149, %p150
      %p152 = scmp.ne.s32.totalorder %s141, %s144
      %p153 = scmp.eq.s32.totalorder %s21, 1
      %p154 = por %p152, %p153
      %p155 = scmp.ne.s32.totalorder %s144, %s145
      %p156 = scmp.eq.s32.totalorder %s21, 0
      %p157 = por %p155, %p156
      %p158 = scmp.ne.s32.totalorder %s144, %s145
      %p159 = scmp.eq.s32.totalorder %s22, 1
      %p160 = por %p158, %p159
      %p162 = scmp.ne.s32.totalorder %s145, %s161
      %p163 = scmp.eq.s32.totalorder %s22, 0
      %p164 = por %p162, %p163
      %s165 = ssub.s32 %s16, %s23
      %p166 = scmp.eq.s32.totalorder %s165, 0
      %s168 = sadd.s32 %s167, 1
      %s169 = scalar_select %p166, %s167, %s168
      %p172 = pneg %p166
      %p173 = scmp.eq.s32.totalorder %s16, 1
      %p174 = por %p172, %p173
      %p175 = scmp.ne.s32.totalorder %s167, %s170
      %p176 = scmp.eq.s32.totalorder %s16, 0
      %p177 = por %p175, %p176
      %p178 = scmp.ne.s32.totalorder %s167, %s170
      %p179 = scmp.eq.s32.totalorder %s21, 1
      %p180 = por %p178, %p179
      %p181 = scmp.ne.s32.totalorder %s170, %s171
      %p182 = scmp.eq.s32.totalorder %s21, 0
      %p183 = por %p181, %p182
      %p184 = scmp.ne.s32.totalorder %s170, %s171
      %p185 = scmp.eq.s32.totalorder %s22, 1
      %p186 = por %p184, %p185
      %p188 = scmp.ne.s32.totalorder %s171, %s187
      %p189 = scmp.eq.s32.totalorder %s22, 0
      %p190 = por %p188, %p189
      %p191 = scmp.le.s32.totalorder 1, %s16
      %p192 = scmp.lt.s32.totalorder %s16, 3
      %p193 = pnand %p191, %p192
      %p194 = pneg %p193
      // Predicated region
      $region9: #{tpu_custom_call.1} parent=5 // pred_check
        _
      $region10: #{tpu_custom_call.1} parent=5 // pred_check_branch
        %196 = sbr.rel (%p193) target = $region12
      $region11: #{tpu_custom_call.1} parent=5 // pred_region
        %s197 = ssub.s32 %s16, 1
        // Predicated region
        $region13: #{tpu_custom_call.1} parent=11 // pred_check
          %p198 = pneg %p37
        $region14: #{tpu_custom_call.1} parent=11 // pred_check_branch
          %200 = sbr.rel (%p198) target = $region16
        $region15: #{tpu_custom_call.1} parent=11 // pred_region
          _
        $region16: #{tpu_custom_call.1} parent=11 // pred_fallthru
          _
        // Predicated region
        $region17: #{tpu_custom_call.1} parent=11 // pred_check
          %p201 = pneg %p58
        $region18: #{tpu_custom_call.1} parent=11 // pred_check_branch
          %203 = sbr.rel (%p201) target = $region20
        $region19: #{tpu_custom_call.1} parent=11 // pred_region
          _
        $region20: #{tpu_custom_call.1} parent=11 // pred_fallthru
          _
        // Predicated region
        $region21: #{tpu_custom_call.1} parent=11 // pred_check
          %p204 = pneg %p79
        $region22: #{tpu_custom_call.1} parent=11 // pred_check_branch
          %206 = sbr.rel (%p204) target = $region24
        $region23: #{tpu_custom_call.1} parent=11 // pred_region
          _
        $region24: #{tpu_custom_call.1} parent=11 // pred_fallthru
          _
      $region12: #{tpu_custom_call.1} parent=5 // pred_fallthru
        _
      %p207 = scmp.lt.s32.totalorder %s16, 2
      // Predicated region
      $region25: #{tpu_custom_call.1} parent=5 // pred_check
        %p208 = pneg %p207
      $region26: #{tpu_custom_call.1} parent=5 // pred_check_branch
        %210 = sbr.rel (%p208) target = $region28
      $region27: #{tpu_custom_call.1} parent=5 // pred_region
        // Predicated region
        $region29: #{tpu_custom_call.1} parent=27 // pred_check
          %p211 = pneg %p99
        $region30: #{tpu_custom_call.1} parent=27 // pred_check_branch
          %213 = sbr.rel (%p211) target = $region32
        $region31: #{tpu_custom_call.1} parent=27 // pred_region
          %p214 = scmp.lt.s32.totalorder %s16, 1
          %s215 = scalar_select %p214, %s16, 1
          %s216 = smul.addr %s215, 4
          %s217 = scalar_lea.vmem %s3, %s216
        $region32: #{tpu_custom_call.1} parent=27 // pred_fallthru
          _
      $region28: #{tpu_custom_call.1} parent=5 // pred_fallthru
        _
      %p218 = scmp.le.s32.totalorder 1, %s16
      %p219 = scmp.lt.s32.totalorder %s16, 3
      %p220 = pnand %p218, %p219
      %p221 = pneg %p220
      // Predicated region
      $region33: #{tpu_custom_call.1} parent=5 // pred_check
        _
      $region34: #{tpu_custom_call.1} parent=5 // pred_check_branch
        %223 = sbr.rel (%p220) target = $region36
      $region35: #{tpu_custom_call.1} parent=5 // pred_region
        %s224 = ssub.s32 %s16, 1
        %p225 = pneg %p37
        %p226 = pneg %p34
        %p227 = pneg %p58
        %p228 = pneg %p55
        %p229 = pneg %p79
        %p230 = pneg %p76
        %p231 = scmp.lt.s32.totalorder %s21, 1
        %s232 = scalar_select %p231, %s21, 1
        %s233 = smul.addr %s232, 4
        %s234 = scalar_lea.vmem %s3, %s233
        %p235 = pneg %p105
        %p236 = pneg %p102
        %p237 = pneg %p131
        %p238 = pneg %p128
        %s239 = sand.u32 %s118, 1
        %s240 = scalar_lea.sflag [#allocation3], %s239
        %s241 = sand.u32 %s118, 1
        %s242 = smul.addr %s241, 4
        %s243 = scalar_lea.vmem [#allocation2], %s242
        %p244 = pneg %p157
        %p245 = pneg %p154
        %p246 = scmp.lt.s32.totalorder %s21, 1
        %s247 = scalar_select %p246, %s21, 1
        %s248 = smul.addr %s247, 4
        %s249 = scalar_lea.vmem %s5, %s248
        %p250 = pneg %p183
        %p251 = pneg %p180
        %p252 = scmp.lt.s32.totalorder %s21, 1
        %s253 = scalar_select %p252, %s21, 1
        %s254 = smul.addr %s253, 4
        %s255 = scalar_lea.vmem %s6, %s254
        %p256 = scmp.lt.s32.totalorder %s21, 1
        %s257 = scalar_select %p256, %s21, 1
        %s258 = smul.addr %s257, 4
        %s259 = scalar_lea.vmem %s3, %s258
        %p260 = scmp.lt.s32.totalorder %s21, 1
        %s261 = scalar_select %p260, %s21, 1
        %s262 = smul.addr %s261, 4
        %s263 = scalar_lea.vmem %s5, %s262
        %p264 = scmp.lt.s32.totalorder %s21, 1
        %s265 = scalar_select %p264, %s21, 1
        %s266 = smul.addr %s265, 4
        %s267 = scalar_lea.vmem %s6, %s266
        %v268 = vld [vmem:[%s259] sm:$0xf]
        %v269 = vld [vmem:[%s2] sm:$0xf]
        %271 = vrot.lane.b32.xlu0 %v268, 3
        %v272 = vpop.permute.xlu0 %271
        %vm274 = vcmask 23552
        %v275 = vsel %vm274, 0.0, %v272
        %vm276 = vcmask 154624
        %v277 = vsel %vm276, %v275, 0.0
        %v279 = vrot.slane %v277, 4
        %280 = vrot.lane.b32.xlu0 %v279, 127
        %v281 = vpop.permute.xlu0 %280
        %283 = vrot.lane.b32.xlu0 %v277, 126
        %v284 = vpop.permute.xlu0 %283
        %286 = vrot.lane.b32.xlu0 %v279, 125
        %v287 = vpop.permute.xlu0 %286
        %289 = vrot.lane.b32.xlu0 %v277, 124
        %v290 = vpop.permute.xlu0 %289
        %292 = vrot.lane.b32.xlu0 %v279, 123
        %v293 = vpop.permute.xlu0 %292
        %295 = vrot.lane.b32.xlu0 %v277, 122
        %v296 = vpop.permute.xlu0 %295
        %298 = vrot.lane.b32.xlu0 %v279, 121
        %v299 = vpop.permute.xlu0 %298
        %vm301 = vcmask 1043456
        %v302 = vsel %vm301, %v277, %v281
        %v303 = vsel %vm301, %v284, %v287
        %v304 = vsel %vm301, %v290, %v293
        %v305 = vsel %vm301, %v296, %v299
        %vm306 = vcmask 261120
        %v308 = vsel %vm306, %v269, 0
        %310 = vmatprep.subr.mxu0 0.0
        %311 = vmatpush1.msra.mxu0 %v302
        %312 = vmatprep.subr.mxu0 0.0
        %313 = vmatpush1.msra.mxu0 %v303
        %314 = vmatprep.subr.mxu0 0.0
        %315 = vmatpush1.msra.mxu0 %v304
        %316 = vmatprep.subr.mxu0 0.0
        %317 = vmatpush1.msra.mxu0 %v305
        %318 = vmatprep.subr.mxu0 0.0
        %319 = vmatpush1.msra.mxu0 0.0
        %320 = vmatprep.subr.mxu0 0.0
        %321 = vmatpush1.msra.mxu0 0.0
        %322 = vmatprep.subr.mxu0 0.0
        %323 = vmatpush1.msra.mxu0 0.0
        %324 = vmatprep.subr.mxu0 0.0
        %325 = vmatpush1.msra.mxu0 0.0
        %326 = vmatprep.subr.mxu0 0.0
        %327 = vmatpush1.msra.mxu0 0.0
        %328 = vmatprep.subr.mxu0 0.0
        %329 = vmatpush1.msra.mxu0 0.0
        %330 = vmatprep.subr.mxu0 0.0
        %331 = vmatpush1.msra.mxu0 0.0
        %332 = vmatprep.subr.mxu0 0.0
        %333 = vmatpush1.msra.mxu0 0.0
        %334 = vmatprep.subr.mxu0 0.0
        %335 = vmatpush1.msra.mxu0 0.0
        %336 = vmatprep.subr.mxu0 0.0
        %337 = vmatpush1.msra.mxu0 0.0
        %338 = vmatprep.subr.mxu0 0.0
        %339 = vmatpush1.msra.mxu0 0.0
        %340 = vmatprep.subr.mxu0 0.0
        %341 = vmatpush1.msra.mxu0 0.0
        %342 = vmatprep.subr.mxu0 0.0
        %343 = vmatpush1.msra.mxu0 0.0
        %344 = vmatprep.subr.mxu0 0.0
        %345 = vmatpush1.msra.mxu0 0.0
        %346 = vmatprep.subr.mxu0 0.0
        %347 = vmatpush1.msra.mxu0 0.0
        %348 = vmatprep.subr.mxu0 0.0
        %349 = vmatpush1.msra.mxu0 0.0
        %350 = vmatprep.subr.mxu0 0.0
        %351 = vmatpush1.msra.mxu0 0.0
        %352 = vmatprep.subr.mxu0 0.0
        %353 = vmatpush1.msra.mxu0 0.0
        %354 = vmatprep.subr.mxu0 0.0
        %355 = vmatpush1.msra.mxu0 0.0
        %356 = vmatprep.subr.mxu0 0.0
        %357 = vmatpush1.msra.mxu0 0.0
        %358 = vmatprep.subr.mxu0 0.0
        %359 = vmatpush1.msra.mxu0 0.0
        %360 = vmatprep.subr.mxu0 0.0
        %361 = vmatpush1.msra.mxu0 0.0
        %362 = vmatprep.subr.mxu0 0.0
        %363 = vmatpush1.msra.mxu0 0.0
        %364 = vmatprep.subr.mxu0 0.0
        %365 = vmatpush1.msra.mxu0 0.0
        %366 = vmatprep.subr.mxu0 0.0
        %367 = vmatpush1.msra.mxu0 0.0
        %368 = vmatprep.subr.mxu0 0.0
        %369 = vmatpush1.msra.mxu0 0.0
        %370 = vmatprep.subr.mxu0 0.0
        %371 = vmatpush1.msra.mxu0 0.0
        %372 = vmatprep.subr.mxu0 0.0
        %373 = vmatpush1.msra.mxu0 0.0
        %374 = vmatprep.mubr.f32.mxu0 0.0
        %375 = vmatmul.mubr.f32.gmra.mrb[0].mxu0 %v308
        %v376 = vpop.f32.mrb[0].mxu0
        %v377 = vadd.f32 0.0, %v376
        %v378 = vpop.f32.mrb[0].mxu0
        %379 = vdwg.mxu0
        %vm380 = vcmask 125952
        %381 = vst.msk [vmem:[%s243] sm:$0xf] %vm380, %v377
        %v382 = vsel %vm380, %v377, 0.0
        %383 = vadd.xlane.f32.xlu0 %v382
        %v384 = vpop.xlane.xlu0 %383
        %vm385 = vcmask 3072
        %386 = vst.msk [vmem:[%s263] sm:$0xf] %vm385, %v384
        %v387 = vmul.f32 %v377, %v377
        %v388 = vsel %vm380, %v387, 0.0
        %389 = vadd.xlane.f32.xlu0 %v388
        %v390 = vpop.xlane.xlu0 %389
        %391 = vst.msk [vmem:[%s267] sm:$0xf] %vm385, %v390
        %s392 = sand.u32 %s118, 1
        %s393 = scalar_lea.sflag [#allocation3], %s392
        %s394 = sand.u32 %s118, 1
        %s395 = smul.addr %s394, 4
        %s396 = scalar_lea.vmem [#allocation2], %s395
        %p397 = scmp.lt.s32.totalorder %s21, 1
        %s398 = scalar_select %p397, %s21, 1
        %s399 = smul.addr %s398, 4
        %s400 = scalar_lea.vmem %s5, %s399
        %p401 = scmp.lt.s32.totalorder %s21, 1
        %s402 = scalar_select %p401, %s21, 1
        %s403 = smul.addr %s402, 4
        %s404 = scalar_lea.vmem %s6, %s403
        // Predicated region
        $region37: #{tpu_custom_call.1} parent=35 // pred_check
          %p405 = pneg %p128
        $region38: #{tpu_custom_call.1} parent=35 // pred_check_branch
          %407 = sbr.rel (%p405) target = $region40
        $region39: #{tpu_custom_call.1} parent=35 // pred_region
          %s409 = ssub.s32 64, 64
          %410 = vsyncadd %s393, %s409
          %s411 = smul.addr %s21, 64
          %s412 = scalar_lea.hbm %s4, %s411
          %s414 = sshll.u32 %s396, 4
          %s415 = int_to_ptr.vmem [resolvable:$true] %s414
          %417 = dma.vmem_to_hbm [thread:$0]  %s415, 64, %s412, %s393
        $region40: #{tpu_custom_call.1} parent=35 // pred_fallthru
          _
        // Predicated region
        $region41: #{tpu_custom_call.1} parent=35 // pred_check
          %p418 = pneg %p154
        $region42: #{tpu_custom_call.1} parent=35 // pred_check_branch
          %420 = sbr.rel (%p418) target = $region44
        $region43: #{tpu_custom_call.1} parent=35 // pred_region
          _
        $region44: #{tpu_custom_call.1} parent=35 // pred_fallthru
          _
        // Predicated region
        $region45: #{tpu_custom_call.1} parent=35 // pred_check
          %p421 = pneg %p180
        $region46: #{tpu_custom_call.1} parent=35 // pred_check_branch
          %423 = sbr.rel (%p421) target = $region48
        $region47: #{tpu_custom_call.1} parent=35 // pred_region
          _
        $region48: #{tpu_custom_call.1} parent=35 // pred_fallthru
          _
      $region36: #{tpu_custom_call.1} parent=5 // pred_fallthru
        _
      %p424 = scmp.le.s32.totalorder 2, %s16
      // Predicated region
      $region49: #{tpu_custom_call.1} parent=5 // pred_check
        %p425 = pneg %p424
      $region50: #{tpu_custom_call.1} parent=5 // pred_check_branch
        %427 = sbr.rel (%p425) target = $region52
      $region51: #{tpu_custom_call.1} parent=5 // pred_region
        %s428 = ssub.s32 %s16, 2
        // Predicated region
        $region53: #{tpu_custom_call.1} parent=51 // pred_check
          %p429 = pneg %p134
        $region54: #{tpu_custom_call.1} parent=51 // pred_check_branch
          %431 = sbr.rel (%p429) target = $region56
        $region55: #{tpu_custom_call.1} parent=51 // pred_region
          %s432 = sand.u32 %s119, 1
          %s433 = scalar_lea.sflag [#allocation3], %s432
          %s434 = sand.u32 %s119, 1
          %s435 = smul.addr %s434, 4
          %s436 = scalar_lea.vmem [#allocation2], %s435
          %437 = dma.done %s433, 64
        $region56: #{tpu_custom_call.1} parent=51 // pred_fallthru
          _
        // Predicated region
        $region57: #{tpu_custom_call.1} parent=51 // pred_check
          %p438 = pneg %p160
        $region58: #{tpu_custom_call.1} parent=51 // pred_check_branch
          %440 = sbr.rel (%p438) target = $region60
        $region59: #{tpu_custom_call.1} parent=51 // pred_region
          %p441 = scmp.lt.s32.totalorder %s22, 1
          %s442 = scalar_select %p441, %s22, 1
          %s443 = smul.addr %s442, 4
          %s444 = scalar_lea.vmem %s5, %s443
        $region60: #{tpu_custom_call.1} parent=51 // pred_fallthru
          _
        // Predicated region
        $region61: #{tpu_custom_call.1} parent=51 // pred_check
          %p445 = pneg %p186
        $region62: #{tpu_custom_call.1} parent=51 // pred_check_branch
          %447 = sbr.rel (%p445) target = $region64
        $region63: #{tpu_custom_call.1} parent=51 // pred_region
          %p448 = scmp.lt.s32.totalorder %s22, 1
          %s449 = scalar_select %p448, %s22, 1
          %s450 = smul.addr %s449, 4
          %s451 = scalar_lea.vmem %s6, %s450
        $region64: #{tpu_custom_call.1} parent=51 // pred_fallthru
          _
      $region52: #{tpu_custom_call.1} parent=5 // pred_fallthru
        _
    $region6: #{tpu_custom_call.1} parent=1 // loop_footer
      %s20 = sadd.s32 1, %s16
    $region7: #{tpu_custom_call.1} parent=1 // loop_footer_branch
      %15 = sbr.rel target = $region3
    $region8: #{tpu_custom_call.1} parent=1 // loop_exit
      _
    %452 = vsyncpa [#allocation3], 1
    %s453 = scalar_lea.sflag [#allocation3], 1
    %454 = vsyncpa %s453, 1

</llo_original>
